<compile_context>
chip_gen: v6e
topology: v6e:2x2x1
jax: 0.10.0
libtpu: 0.0.40
codegen_flags: <defaults>
</compile_context>

<pallas_src>
import functools

import jax
import jax.numpy as jnp
from jax.experimental import pallas as pl
from jax.experimental.pallas import tpu as pltpu

_BN_EPS = 1e-5


def _round_up(x, m):
    return (x + m - 1) // m * m


def _cdiv(a, b):
    return -(-a // b)


# ---------------- Pass 1: BN partial stats only (no conv output to HBM) -------------
def _stats_kernel(w_ref, x_ref, stats_ref):
    # w_ref:     (Cout2, Cin2p) bf16  (resident)
    # x_ref:     (Cin2p, TN)    bf16  lane-dense spectral tile
    # stats_ref: (Cout2, 2)     f32   resident across the inner ('arbitrary') axis;
    #                                 written back to HBM once per (batch, chunk).
    k = pl.program_id(2)

    @pl.when(k == 0)
    def _():
        stats_ref[...] = jnp.zeros_like(stats_ref)

    y = jnp.dot(w_ref[...], x_ref[...], preferred_element_type=jnp.float32)
    s = jnp.sum(y, axis=-1, keepdims=True)        # (Cout2, 1)
    ss = jnp.sum(y * y, axis=-1, keepdims=True)   # (Cout2, 1)
    stats_ref[...] += jnp.concatenate([s, ss], axis=-1)


# ---------------- Pass 2: fused conv + BN-apply + ReLU -------------------------------
def _conv_bn_relu_kernel(w_ref, scale_ref, shift_ref, x_ref, o_ref):
    # w:(Cout2,Cin2p) bf16, scale/shift:(Cout2,1) f32, x:(Cin2p,TN) bf16, o:(Cout2,TN) f32
    y = jnp.dot(w_ref[...], x_ref[...], preferred_element_type=jnp.float32)
    o_ref[...] = jnp.maximum(y * scale_ref[...] + shift_ref[...], 0.0)


def _spectral_conv_bn_relu(x3d, w_bf, gamma, beta, *, n_valid, tn, n_chunks, inner):
    """1x1 conv + BN(train-mode batch stats) + ReLU on the bf16 spectral matrix.

    x3d:  (B, Cin2p, L_pad) bf16, zero-padded channels/columns (pads contribute 0)
    w_bf: (Cout2, Cin2p)    bf16 conv weight (zero-padded columns)
    Returns (B, Cout2, L_pad) f32.
    """
    B, cin2p, l_pad = x3d.shape
    cout2 = w_bf.shape[0]
    assert l_pad % tn == 0
    n_tiles = l_pad // tn
    assert n_tiles == n_chunks * inner

    # VMEM budget: double-buffered X / out tiles + resident weight + small vectors,
    # with 2x headroom, capped generation-aware (v7x only has 64 MiB).
    est = (2 * cin2p * tn * 2        # X tile, bf16, double-buffered
           + 2 * cout2 * tn * 4      # out tile, f32, double-buffered
           + cout2 * cin2p * 2       # resident weight
           + cout2 * 4 * 4)          # scale/shift/stats
    try:
        vmem_phys = pltpu.get_tpu_info().vmem_capacity_bytes
    except Exception:
        vmem_phys = 64 * 2**20       # conservative (v7x) fallback
    vmem_limit = int(min(int(0.75 * vmem_phys), max(32 * 2**20, 2 * est)))

    # ---- Pass 1: per-(batch, chunk) partial stats, inner L-tile axis accumulated
    #      in the resident output block.  (batch, chunk) are 'parallel' -> megacore. ----
    stats = pl.pallas_call(
        _stats_kernel,
        out_shape=jax.ShapeDtypeStruct((B, n_chunks, cout2, 2), jnp.float32),
        grid=(B, n_chunks, inner),
        in_specs=[
            pl.BlockSpec((cout2, cin2p), lambda b, c, k: (0, 0)),                   # weight
            pl.BlockSpec((None, cin2p, tn), lambda b, c, k: (b, 0, c * inner + k)),  # X tile
        ],
        out_specs=pl.BlockSpec((None, None, cout2, 2), lambda b, c, k: (b, c, 0, 0)),
        compiler_params=pltpu.CompilerParams(
            dimension_semantics=("parallel", "parallel", "arbitrary"),
            vmem_limit_bytes=vmem_limit,
        ),
    )(w_bf, x3d)

    # ---- Fold tiny partial stats -> global BN scale/shift (plain JAX) ----
    # Zero-padded channels/columns contribute 0 to sum/sumsq; divide by the true count.
    count = jnp.float32(n_valid)
    sums = jnp.sum(stats[..., 0], axis=(0, 1))        # (Cout2,)
    sumsqs = jnp.sum(stats[..., 1], axis=(0, 1))      # (Cout2,)
    mean = sums / count
    var = jnp.maximum(sumsqs / count - mean * mean, 0.0)   # biased var (BN train mode)
    scale = gamma.astype(jnp.float32) * jax.lax.rsqrt(var + _BN_EPS)
    shift = beta.astype(jnp.float32) - mean * scale
    scale2 = scale.reshape(cout2, 1)
    shift2 = shift.reshape(cout2, 1)

    # ---- Pass 2: fused out = max((W @ X) * scale + shift, 0), fully parallel grid ----
    out = pl.pallas_call(
        _conv_bn_relu_kernel,
        out_shape=jax.ShapeDtypeStruct((B, cout2, l_pad), jnp.float32),
        grid=(B, n_tiles),
        in_specs=[
            pl.BlockSpec((cout2, cin2p), lambda b, n: (0, 0)),
            pl.BlockSpec((cout2, 1), lambda b, n: (0, 0)),
            pl.BlockSpec((cout2, 1), lambda b, n: (0, 0)),
            pl.BlockSpec((None, cin2p, tn), lambda b, n: (b, 0, n)),
        ],
        out_specs=pl.BlockSpec((None, cout2, tn), lambda b, n: (b, 0, n)),
        compiler_params=pltpu.CompilerParams(
            dimension_semantics=("parallel", "parallel"),
            vmem_limit_bytes=vmem_limit,
        ),
    )(w_bf, scale2, shift2, x3d)
    return out


def fourier_unit_forward(x, conv_w, bn_gamma, bn_beta, *, tn=1024):
    """FourierUnit.forward.

    x:        (B, C, H, W) float32, NCHW
    conv_w:   (2C_out, 2C_in) 1x1 conv weight (PyTorch (O, I, 1, 1) squeezed)
    bn_gamma: (2C_out,), bn_beta: (2C_out,)
    returns:  (B, C_out, H, W) float32   (requires C_out == C for the complex split)
    """
    B, C, H, W = x.shape
    xf = jnp.fft.rfftn(x, axes=(-2, -1), norm="ortho")            # (B, C, H, Wf) complex
    Wf = xf.shape[-1]
    cin2 = 2 * C
    cout2 = conv_w.shape[0]
    L = H * Wf

    # Lane tile: multiple of 128, clamped to the padded spectral length.
    tn = min(tn, _round_up(L, 128))
    assert tn % 128 == 0, f"tn must be a multiple of 128, got {tn}"
    n_tiles = _cdiv(L, tn)

    # Chunk the L-tile axis so Pass 1 keeps >= ~8 parallel grid points even at B=1..2
    # (v7x megacore), with an inner 'arbitrary' accumulation axis per chunk.
    n_chunks = min(n_tiles, max(1, _cdiv(8, B)))
    inner = _cdiv(n_tiles, n_chunks)
    n_chunks = _cdiv(n_tiles, inner)
    n_tiles = n_chunks * inner
    l_pad = n_tiles * tn

    # bf16 contraction dim padded to a full packed-sublane group (16 rows).
    cin2_pad = _round_up(cin2, 16)

    # bf16 spectral matrix, channels-first, L on the lane axis.  Cast BEFORE the
    # concat/reshape/pad so wrapper traffic is 2 B/element instead of 4+2.
    xr = jnp.real(xf).astype(jnp.bfloat16)
    xi = jnp.imag(xf).astype(jnp.bfloat16)
    x3d = jnp.concatenate([xr, xi], axis=1).reshape(B, cin2, L)   # (B, 2C, L) bf16
    x3d = jnp.pad(x3d, ((0, 0), (0, cin2_pad - cin2), (0, l_pad - L)))

    w_bf = jnp.pad(conv_w.astype(jnp.bfloat16), ((0, 0), (0, cin2_pad - cin2)))

    y3d = _spectral_conv_bn_relu(x3d, w_bf, bn_gamma, bn_beta,
                                 n_valid=B * L, tn=tn,
                                 n_chunks=n_chunks, inner=inner)  # (B, 2C_out, L_pad) f32

    y = y3d[:, :, :L].reshape(B, cout2, H, Wf)                    # no transposes needed
    real, imag = jnp.split(y, 2, axis=1)                          # each (B, C_out, H, Wf)
    yc = jax.lax.complex(real, imag)
    return jnp.fft.irfftn(yc, s=(H, W), axes=(-2, -1), norm="ortho")


def _reference_forward(x, conv_w, bn_gamma, bn_beta):
    """Pure-JAX f32 reference (no Pallas) for verification."""
    B, C, H, W = x.shape
    xf = jnp.fft.rfftn(x, axes=(-2, -1), norm="ortho")
    xcat = jnp.concatenate([jnp.real(xf), jnp.imag(xf)], axis=1)   # (B, 2C, H, Wf)
    y = jnp.einsum("oi,bihw->bohw", conv_w, xcat)                  # 1x1 conv, no bias
    mean = jnp.mean(y, axis=(0, 2, 3), keepdims=True)
    var = jnp.mean((y - mean) ** 2, axis=(0, 2, 3), keepdims=True)
    y = (y - mean) / jnp.sqrt(var + _BN_EPS)
    y = y * bn_gamma[None, :, None, None] + bn_beta[None, :, None, None]
    y = jnp.maximum(y, 0.0)
    real, imag = jnp.split(y, 2, axis=1)
    yc = jax.lax.complex(real, imag)
    return jnp.fft.irfftn(yc, s=(H, W), axes=(-2, -1), norm="ortho")


if __name__ == "__main__":
    key = jax.random.PRNGKey(0)
    k_x, k_w, k_g, k_b = jax.random.split(key, 4)

    B, C, H, W = 2, 4, 16, 16          # in_channels == out_channels == 4
    Cin2 = 2 * C
    Cout2 = 2 * C

    x = jax.random.normal(k_x, (B, C, H, W), dtype=jnp.float32)
    conv_w = 0.1 * jax.random.normal(k_w, (Cout2, Cin2), dtype=jnp.float32)
    bn_gamma = 1.0 + 0.05 * jax.random.normal(k_g, (Cout2,), dtype=jnp.float32)
    bn_beta = 0.05 * jax.random.normal(k_b, (Cout2,), dtype=jnp.float32)

    # tn=128 -> L = 16*9 = 144 is padded to 256 and split into 2 lane tiles,
    # exercising the multi-tile grid, the chunked stats accumulation, and the fold.
    fwd = jax.jit(functools.partial(fourier_unit_forward, tn=128))
    out = jax.block_until_ready(fwd(x, conv_w, bn_gamma, bn_beta))

    ref = jax.block_until_ready(_reference_forward(x, conv_w, bn_gamma, bn_beta))

    assert out.shape == (B, C, H, W)
    err = float(jnp.max(jnp.abs(out - ref)))
    # bf16 MXU operands (f32 accumulation) give ~1e-3 relative error which BN
    # normalization amplifies a few x; 3e-2 absolute is a comfortable bound vs
    # the pure-f32 reference at these O(1) magnitudes.
    assert err < 3e-2, f"max abs err {err}"
    print("KERNEL_OK")
</pallas_src>

<mosaic_0001>
module attributes {stable_mosaic.version = 11 : i64} {
  func.func @_stats_kernel(%arg0: i32, %arg1: i32, %arg2: i32, %arg3: memref<8x16xbf16, #tpu.memory_space<vmem>>, %arg4: memref<1x16x128xbf16, #tpu.memory_space<vmem>>, %arg5: memref<1x1x8x2xf32, #tpu.memory_space<vmem>>) attributes {dimension_semantics = [#tpu.dimension_semantics<parallel>, #tpu.dimension_semantics<parallel>, #tpu.dimension_semantics<arbitrary>], iteration_bounds = array<i64: 2, 2, 1>, scalar_prefetch = 0 : i64, scratch_operands = 0 : i64, tpu.core_type = #tpu.core_type<tc>, window_params = [{pipeline_mode = #tpu.pipeline_mode<synchronous>, transform_indices = @transform_0, window_bounds = array<i64: 8, 16>}, {transform_indices = @transform_1, window_bounds = array<i64: 1, 16, 128>}, {transform_indices = @transform_2, window_bounds = array<i64: 1, 1, 8, 2>}]} {
    %c0_i32 = arith.constant 0 : i32
    %0 = arith.cmpi eq, %arg2, %c0_i32 : i32
    %1 = arith.extui %0 : i1 to i32
    %c0_i32_0 = arith.constant 0 : i32
    %2 = arith.cmpi ne, %1, %c0_i32_0 : i32
    scf.if %2 {
      %cst_15 = arith.constant 0.000000e+00 : f32
      %19 = vector.broadcast %cst_15 : f32 to vector<8x2xf32>
      %c0_16 = arith.constant 0 : index
      %c0_17 = arith.constant 0 : index
      %c0_18 = arith.constant 0 : index
      %c0_19 = arith.constant 0 : index
      %20 = vector.load %arg5[%c0_16, %c0_17, %c0_18, %c0_19] : memref<1x1x8x2xf32, #tpu.memory_space<vmem>>, vector<1x1x8x2xf32>
      %21 = vector.shape_cast %20 : vector<1x1x8x2xf32> to vector<8x2xf32>
      %22 = vector.shape_cast %19 : vector<8x2xf32> to vector<1x1x8x2xf32>
      tpu.vector_store %arg5[%c0_16, %c0_17, %c0_18, %c0_19], %22 {strides = array<i32>} : memref<1x1x8x2xf32, #tpu.memory_space<vmem>>, vector<1x1x8x2xf32>,
    } else {
    }
    %c0 = arith.constant 0 : index
    %c0_1 = arith.constant 0 : index
    %3 = vector.load %arg3[%c0, %c0_1] : memref<8x16xbf16, #tpu.memory_space<vmem>>, vector<8x16xbf16>
    %c0_2 = arith.constant 0 : index
    %c0_3 = arith.constant 0 : index
    %c0_4 = arith.constant 0 : index
    %4 = vector.load %arg4[%c0_2, %c0_3, %c0_4] : memref<1x16x128xbf16, #tpu.memory_space<vmem>>, vector<1x16x128xbf16>
    %5 = vector.shape_cast %4 : vector<1x16x128xbf16> to vector<16x128xbf16>
    %cst = arith.constant dense<0.000000e+00> : vector<8x128xf32>
    %6 = tpu.matmul %3, %5, %cst {dimension_numbers = #tpu.dot_dimension_numbers<[1], [0], [0], [1], [0, 0, 1, 1], [], []>} : vector<8x16xbf16>, vector<16x128xbf16>, vector<8x128xf32> -> vector<8x128xf32>
    %cst_5 = arith.constant dense<0.000000e+00> : vector<8xf32>
    %7 = vector.multi_reduction <add>, %6, %cst_5 [1] : vector<8x128xf32> to vector<8xf32>
    %8 = vector.shape_cast %7 : vector<8xf32> to vector<8x1xf32>
    %9 = arith.mulf %6, %6 : vector<8x128xf32>
    %cst_6 = arith.constant dense<0.000000e+00> : vector<8xf32>
    %10 = vector.multi_reduction <add>, %9, %cst_6 [1] : vector<8x128xf32> to vector<8xf32>
    %11 = vector.shape_cast %10 : vector<8xf32> to vector<8x1xf32>
    %c0_7 = arith.constant 0 : index
    %c0_8 = arith.constant 0 : index
    %c0_9 = arith.constant 0 : index
    %c0_10 = arith.constant 0 : index
    %12 = vector.load %arg5[%c0_7, %c0_8, %c0_9, %c0_10] : memref<1x1x8x2xf32, #tpu.memory_space<vmem>>, vector<1x1x8x2xf32>
    %13 = vector.shape_cast %12 : vector<1x1x8x2xf32> to vector<8x2xf32>
    %14 = tpu.concatenate %8, %11 in 1 : vector<8x1xf32>, vector<8x1xf32> -> vector<8x2xf32>
    %15 = arith.addf %13, %14 : vector<8x2xf32>
    %c0_11 = arith.constant 0 : index
    %c0_12 = arith.constant 0 : index
    %c0_13 = arith.constant 0 : index
    %c0_14 = arith.constant 0 : index
    %16 = vector.load %arg5[%c0_11, %c0_12, %c0_13, %c0_14] : memref<1x1x8x2xf32, #tpu.memory_space<vmem>>, vector<1x1x8x2xf32>
    %17 = vector.shape_cast %16 : vector<1x1x8x2xf32> to vector<8x2xf32>
    %18 = vector.shape_cast %15 : vector<8x2xf32> to vector<1x1x8x2xf32>
    tpu.vector_store %arg5[%c0_11, %c0_12, %c0_13, %c0_14], %18 {strides = array<i32>} : memref<1x1x8x2xf32, #tpu.memory_space<vmem>>, vector<1x1x8x2xf32>,
    return
  }
  func.func @transform_0(%arg0: i32, %arg1: i32, %arg2: i32) -> (i32, i32) {
    %c0_i32 = arith.constant 0 : i32
    %c0_i32_0 = arith.constant 0 : i32
    %c0_i32_1 = arith.constant 0 : i32
    return %c0_i32, %c0_i32_0 : i32, i32
  }
  func.func @transform_1(%arg0: i32, %arg1: i32, %arg2: i32) -> (i32, i32, i32) {
    %c1_i32 = arith.constant 1 : i32
    %0 = arith.muli %arg1, %c1_i32 : i32
    %1 = arith.addi %0, %arg2 : i32
    %c0_i32 = arith.constant 0 : i32
    %c0_i32_0 = arith.constant 0 : i32
    return %arg0, %c0_i32, %1 : i32, i32, i32
  }
  func.func @transform_2(%arg0: i32, %arg1: i32, %arg2: i32) -> (i32, i32, i32, i32) {
    %c0_i32 = arith.constant 0 : i32
    %c0_i32_0 = arith.constant 0 : i32
    %c0_i32_1 = arith.constant 0 : i32
    return %arg0, %arg1, %c0_i32, %c0_i32_0 : i32, i32, i32, i32
  }
}

module attributes {stable_mosaic.version = 11 : i64} {
  func.func @_conv_bn_relu_kernel(%arg0: i32, %arg1: i32, %arg2: memref<8x16xbf16, #tpu.memory_space<vmem>>, %arg3: memref<8x1xf32, #tpu.memory_space<vmem>>, %arg4: memref<8x1xf32, #tpu.memory_space<vmem>>, %arg5: memref<1x16x128xbf16, #tpu.memory_space<vmem>>, %arg6: memref<1x8x128xf32, #tpu.memory_space<vmem>>) attributes {dimension_semantics = [#tpu.dimension_semantics<parallel>, #tpu.dimension_semantics<parallel>], iteration_bounds = array<i64: 2, 2>, scalar_prefetch = 0 : i64, scratch_operands = 0 : i64, tpu.core_type = #tpu.core_type<tc>, window_params = [{pipeline_mode = #tpu.pipeline_mode<synchronous>, transform_indices = @transform_0, window_bounds = array<i64: 8, 16>}, {pipeline_mode = #tpu.pipeline_mode<synchronous>, transform_indices = @transform_1, window_bounds = array<i64: 8, 1>}, {pipeline_mode = #tpu.pipeline_mode<synchronous>, transform_indices = @transform_2, window_bounds = array<i64: 8, 1>}, {transform_indices = @transform_3, window_bounds = array<i64: 1, 16, 128>}, {transform_indices = @transform_4, window_bounds = array<i64: 1, 8, 128>}]} {
    %c0 = arith.constant 0 : index
    %c0_0 = arith.constant 0 : index
    %0 = vector.load %arg2[%c0, %c0_0] : memref<8x16xbf16, #tpu.memory_space<vmem>>, vector<8x16xbf16>
    %c0_1 = arith.constant 0 : index
    %c0_2 = arith.constant 0 : index
    %c0_3 = arith.constant 0 : index
    %1 = vector.load %arg5[%c0_1, %c0_2, %c0_3] : memref<1x16x128xbf16, #tpu.memory_space<vmem>>, vector<1x16x128xbf16>
    %2 = vector.shape_cast %1 : vector<1x16x128xbf16> to vector<16x128xbf16>
    %cst = arith.constant dense<0.000000e+00> : vector<8x128xf32>
    %3 = tpu.matmul %0, %2, %cst {dimension_numbers = #tpu.dot_dimension_numbers<[1], [0], [0], [1], [0, 0, 1, 1], [], []>} : vector<8x16xbf16>, vector<16x128xbf16>, vector<8x128xf32> -> vector<8x128xf32>
    %c0_4 = arith.constant 0 : index
    %c0_5 = arith.constant 0 : index
    %4 = vector.load %arg3[%c0_4, %c0_5] : memref<8x1xf32, #tpu.memory_space<vmem>>, vector<8x1xf32>
    %5 = vector.broadcast %4 : vector<8x1xf32> to vector<8x128xf32>
    %6 = arith.mulf %3, %5 : vector<8x128xf32>
    %c0_6 = arith.constant 0 : index
    %c0_7 = arith.constant 0 : index
    %7 = vector.load %arg4[%c0_6, %c0_7] : memref<8x1xf32, #tpu.memory_space<vmem>>, vector<8x1xf32>
    %8 = vector.broadcast %7 : vector<8x1xf32> to vector<8x128xf32>
    %9 = arith.addf %6, %8 : vector<8x128xf32>
    %cst_8 = arith.constant 0.000000e+00 : f32
    %10 = vector.broadcast %cst_8 : f32 to vector<8x128xf32>
    %11 = arith.maximumf %9, %10 : vector<8x128xf32>
    %c0_9 = arith.constant 0 : index
    %c0_10 = arith.constant 0 : index
    %c0_11 = arith.constant 0 : index
    %12 = vector.load %arg6[%c0_9, %c0_10, %c0_11] : memref<1x8x128xf32, #tpu.memory_space<vmem>>, vector<1x8x128xf32>
    %13 = vector.shape_cast %12 : vector<1x8x128xf32> to vector<8x128xf32>
    %14 = vector.shape_cast %11 : vector<8x128xf32> to vector<1x8x128xf32>
    tpu.vector_store %arg6[%c0_9, %c0_10, %c0_11], %14 {strides = array<i32>} : memref<1x8x128xf32, #tpu.memory_space<vmem>>, vector<1x8x128xf32>,
    return
  }
  func.func @transform_0(%arg0: i32, %arg1: i32) -> (i32, i32) {
    %c0_i32 = arith.constant 0 : i32
    %c0_i32_0 = arith.constant 0 : i32
    %c0_i32_1 = arith.constant 0 : i32
    return %c0_i32, %c0_i32_0 : i32, i32
  }
  func.func @transform_1(%arg0: i32, %arg1: i32) -> (i32, i32) {
    %c0_i32 = arith.constant 0 : i32
    %c0_i32_0 = arith.constant 0 : i32
    %c0_i32_1 = arith.constant 0 : i32
    return %c0_i32, %c0_i32_0 : i32, i32
  }
  func.func @transform_2(%arg0: i32, %arg1: i32) -> (i32, i32) {
    %c0_i32 = arith.constant 0 : i32
    %c0_i32_0 = arith.constant 0 : i32
    %c0_i32_1 = arith.constant 0 : i32
    return %c0_i32, %c0_i32_0 : i32, i32
  }
  func.func @transform_3(%arg0: i32, %arg1: i32) -> (i32, i32, i32) {
    %c0_i32 = arith.constant 0 : i32
    %c0_i32_0 = arith.constant 0 : i32
    return %arg0, %c0_i32, %arg1 : i32, i32, i32
  }
  func.func @transform_4(%arg0: i32, %arg1: i32) -> (i32, i32, i32) {
    %c0_i32 = arith.constant 0 : i32
    %c0_i32_0 = arith.constant 0 : i32
    return %arg0, %c0_i32, %arg1 : i32, i32, i32
  }
}

</mosaic_0001>

<llo_original>
// kernel: fourier_unit_forward.3
$region0: #{fourier_unit_forward.3}
  #allocation0 [shape = 'u32[]', space=smem, size = 0x4, offset = 0x4, fixed_abs, tag = 'smem constant byte address 0x4 - core index']
  #allocation1 [shape = 'u32[144,128]{1,0:T(1,128)}', space=vmem, size = 0x12000, scoped, tag = 'internal scratch']
  %s0 = inlined_call_operand.vmem [shape: bf16[8,16], index: 0, kind: input, shape index: {}]
  %s1 = inlined_call_operand.vmem [shape: f32[8,1], index: 1, kind: input, shape index: {}]
  %s2 = inlined_call_operand.vmem [shape: f32[8,1], index: 2, kind: input, shape index: {}]
  %s3 = inlined_call_operand.vmem [shape: bf16[2,16,256], index: 3, kind: input, shape index: {}]
  %s4 = inlined_call_operand.vmem [shape: f32[2,8,256], index: 4, kind: output, shape index: {}]
  %s5 = sld [smem:[#allocation0]]
  $region90: #{fourier_unit_forward.3} parent=0
    _
  %s7 = ssub.s32 1, %s5
  %s8 = scalar_select 0, %s7, %s5
  $region1: #{fourier_unit_forward.3} parent=0
    #allocation2 [shape = 'u8[8192]{0}', space=vmem, size = 0x2000, scoped, tag = 'input window, operand 3']
    loop: start=0, step=1, limit=6
    $region2: #{fourier_unit_forward.3} parent=1 // loop_pre_header
      _
    $region3: #{fourier_unit_forward.3} parent=1 // loop_header
      %s10 = sphi 0, %s14
      %p11 = scmp.ge.s32.totalorder %s10, 6
      %s17 = sphi 0, %s29
      %s18 = sphi 0, %s25
      %s19 = sphi 0, %s17
      %s20 = sphi 0, %s18
      %s21 = sphi 0, %s19
      %s22 = sphi 0, %s20
      %s30 = sphi 0, %s30
      %s32 = sphi 0, %s30
      %s33 = sphi 0, %s32
      %s47 = sphi 0, %s33
      %s51 = sphi 0, %s51
      %s53 = sphi 0, %s51
      %s54 = sphi 0, %s53
      %s68 = sphi 0, %s54
      %s72 = sphi 0, %s72
      %s74 = sphi 0, %s72
      %s75 = sphi 0, %s74
      %s89 = sphi 0, %s75
      %s97 = sphi 0, %s99
      %s100 = sphi 0, %s97
      %s101 = sphi 0, %s100
      %s117 = sphi 0, %s101
      %s125 = sphi 0, %s127
      %s128 = sphi 0, %s125
      %s129 = sphi 0, %s128
      %s145 = sphi 0, %s129
    $region4: #{fourier_unit_forward.3} parent=1 // loop_header_branch
      %13 = sbr.rel (%p11) target = $region8
    $region5: #{fourier_unit_forward.3} parent=1 // loop_body
      %s15 = ssub.s32 %s10, 1
      %s16 = ssub.s32 %s10, 2
      %s23 = sadd.s32 1, %s18
      %p24 = scmp.ge.s32.totalorder %s23, 2
      %s25 = scalar_select %p24, 0, %s23
      %s26 = sadd.s32 1, %s17
      %s27 = scalar_select %p24, %s26, %s17
      %p28 = scmp.ge.s32.totalorder %s27, 2
      %s29 = scalar_select %p28, 0, %s27
      %s31 = sadd.s32 %s30, 1
      %p34 = scmp.eq.s32.totalorder %s10, 3
      %p35 = scmp.ne.s32.totalorder %s30, %s32
      %p36 = scmp.eq.s32.totalorder %s10, 0
      %p37 = por %p35, %p36
      %p38 = scmp.ne.s32.totalorder %s30, %s32
      %p39 = scmp.eq.s32.totalorder %s15, 3
      %p40 = por %p38, %p39
      %p41 = scmp.ne.s32.totalorder %s32, %s33
      %p42 = scmp.eq.s32.totalorder %s15, 0
      %p43 = por %p41, %p42
      %p44 = scmp.ne.s32.totalorder %s32, %s33
      %p45 = scmp.eq.s32.totalorder %s16, 3
      %p46 = por %p44, %p45
      %p48 = scmp.ne.s32.totalorder %s33, %s47
      %p49 = scmp.eq.s32.totalorder %s16, 0
      %p50 = por %p48, %p49
      %s52 = sadd.s32 %s51, 1
      %p55 = scmp.eq.s32.totalorder %s10, 3
      %p56 = scmp.ne.s32.totalorder %s51, %s53
      %p57 = scmp.eq.s32.totalorder %s10, 0
      %p58 = por %p56, %p57
      %p59 = scmp.ne.s32.totalorder %s51, %s53
      %p60 = scmp.eq.s32.totalorder %s15, 3
      %p61 = por %p59, %p60
      %p62 = scmp.ne.s32.totalorder %s53, %s54
      %p63 = scmp.eq.s32.totalorder %s15, 0
      %p64 = por %p62, %p63
      %p65 = scmp.ne.s32.totalorder %s53, %s54
      %p66 = scmp.eq.s32.totalorder %s16, 3
      %p67 = por %p65, %p66
      %p69 = scmp.ne.s32.totalorder %s54, %s68
      %p70 = scmp.eq.s32.totalorder %s16, 0
      %p71 = por %p69, %p70
      %s73 = sadd.s32 %s72, 1
      %p76 = scmp.eq.s32.totalorder %s10, 3
      %p77 = scmp.ne.s32.totalorder %s72, %s74
      %p78 = scmp.eq.s32.totalorder %s10, 0
      %p79 = por %p77, %p78
      %p80 = scmp.ne.s32.totalorder %s72, %s74
      %p81 = scmp.eq.s32.totalorder %s15, 3
      %p82 = por %p80, %p81
      %p83 = scmp.ne.s32.totalorder %s74, %s75
      %p84 = scmp.eq.s32.totalorder %s15, 0
      %p85 = por %p83, %p84
      %p86 = scmp.ne.s32.totalorder %s74, %s75
      %p87 = scmp.eq.s32.totalorder %s16, 3
      %p88 = por %p86, %p87
      %p90 = scmp.ne.s32.totalorder %s75, %s89
      %p91 = scmp.eq.s32.totalorder %s16, 0
      %p92 = por %p90, %p91
      %s93 = ssub.s32 %s17, %s29
      %s94 = ssub.s32 %s18, %s25
      %s95 = sor.u32 %s93, %s94
      %p96 = scmp.eq.s32.totalorder %s95, 0
      %s98 = sadd.s32 %s97, 1
      %s99 = scalar_select %p96, %s97, %s98
      %p102 = pneg %p96
      %p103 = scmp.eq.s32.totalorder %s10, 3
      %p104 = por %p102, %p103
      %p105 = scmp.ne.s32.totalorder %s97, %s100
      %p106 = scmp.eq.s32.totalorder %s10, 0
      %p107 = por %p105, %p106
      %p108 = scmp.ne.s32.totalorder %s97, %s100
      %p109 = scmp.eq.s32.totalorder %s15, 3
      %p110 = por %p108, %p109
      %p111 = scmp.ne.s32.totalorder %s100, %s101
      %p112 = scmp.eq.s32.totalorder %s15, 0
      %p113 = por %p111, %p112
      %p114 = scmp.ne.s32.totalorder %s100, %s101
      %p115 = scmp.eq.s32.totalorder %s16, 3
      %p116 = por %p114, %p115
      %p118 = scmp.ne.s32.totalorder %s101, %s117
      %p119 = scmp.eq.s32.totalorder %s16, 0
      %p120 = por %p118, %p119
      %s121 = ssub.s32 %s17, %s29
      %s122 = ssub.s32 %s18, %s25
      %s123 = sor.u32 %s121, %s122
      %p124 = scmp.eq.s32.totalorder %s123, 0
      %s126 = sadd.s32 %s125, 1
      %s127 = scalar_select %p124, %s125, %s126
      %p130 = pneg %p124
      %p131 = scmp.eq.s32.totalorder %s10, 3
      %p132 = por %p130, %p131
      %p133 = scmp.ne.s32.totalorder %s125, %s128
      %p134 = scmp.eq.s32.totalorder %s10, 0
      %p135 = por %p133, %p134
      %p136 = scmp.ne.s32.totalorder %s125, %s128
      %p137 = scmp.eq.s32.totalorder %s15, 3
      %p138 = por %p136, %p137
      %p139 = scmp.ne.s32.totalorder %s128, %s129
      %p140 = scmp.eq.s32.totalorder %s15, 0
      %p141 = por %p139, %p140
      %p142 = scmp.ne.s32.totalorder %s128, %s129
      %p143 = scmp.eq.s32.totalorder %s16, 3
      %p144 = por %p142, %p143
      %p146 = scmp.ne.s32.totalorder %s129, %s145
      %p147 = scmp.eq.s32.totalorder %s16, 0
      %p148 = por %p146, %p147
      %p149 = scmp.le.s32.totalorder 1, %s10
      %p150 = scmp.lt.s32.totalorder %s10, 5
      %p151 = pnand %p149, %p150
      %p152 = pneg %p151
      // Predicated region
      $region9: #{fourier_unit_forward.3} parent=5 // pred_check
        _
      $region10: #{fourier_unit_forward.3} parent=5 // pred_check_branch
        %154 = sbr.rel (%p151) target = $region12
      $region11: #{fourier_unit_forward.3} parent=5 // pred_region
        %s155 = ssub.s32 %s10, 1
        // Predicated region
        $region13: #{fourier_unit_forward.3} parent=11 // pred_check
          %p156 = pneg %p43
        $region14: #{fourier_unit_forward.3} parent=11 // pred_check_branch
          %158 = sbr.rel (%p156) target = $region16
        $region15: #{fourier_unit_forward.3} parent=11 // pred_region
          _
        $region16: #{fourier_unit_forward.3} parent=11 // pred_fallthru
          _
        // Predicated region
        $region17: #{fourier_unit_forward.3} parent=11 // pred_check
          %p159 = pneg %p64
        $region18: #{fourier_unit_forward.3} parent=11 // pred_check_branch
          %161 = sbr.rel (%p159) target = $region20
        $region19: #{fourier_unit_forward.3} parent=11 // pred_region
          _
        $region20: #{fourier_unit_forward.3} parent=11 // pred_fallthru
          _
        // Predicated region
        $region21: #{fourier_unit_forward.3} parent=11 // pred_check
          %p162 = pneg %p85
        $region22: #{fourier_unit_forward.3} parent=11 // pred_check_branch
          %164 = sbr.rel (%p162) target = $region24
        $region23: #{fourier_unit_forward.3} parent=11 // pred_region
          _
        $region24: #{fourier_unit_forward.3} parent=11 // pred_fallthru
          _
      $region12: #{fourier_unit_forward.3} parent=5 // pred_fallthru
        _
      %p165 = scmp.lt.s32.totalorder %s10, 4
      // Predicated region
      $region25: #{fourier_unit_forward.3} parent=5 // pred_check
        %p166 = pneg %p165
      $region26: #{fourier_unit_forward.3} parent=5 // pred_check_branch
        %168 = sbr.rel (%p166) target = $region28
      $region27: #{fourier_unit_forward.3} parent=5 // pred_region
        // Predicated region
        $region29: #{fourier_unit_forward.3} parent=27 // pred_check
          %p169 = pneg %p107
        $region30: #{fourier_unit_forward.3} parent=27 // pred_check_branch
          %171 = sbr.rel (%p169) target = $region32
        $region31: #{fourier_unit_forward.3} parent=27 // pred_region
          %s172 = sand.u32 %s97, 1
          %s173 = sand.u32 %s97, 1
          %s174 = smul.addr %s173, 8
          %s175 = scalar_lea.vmem [#allocation2], %s174
          %s176 = smul.addr %s17, 4
          %s177 = sadd.s32 %s18, %s176
          %s178 = smul.addr %s177, 4
          %s179 = scalar_lea.vmem %s3, %s178
          // Predicated region
          $region33: #{fourier_unit_forward.3} parent=31 // pred_check
            _
          $region34: #{fourier_unit_forward.3} parent=31 // pred_check_branch
            %181 = sbr.rel (0) target = $region36
          $region35: #{fourier_unit_forward.3} parent=31 // pred_region
            // Predicated region
            $region37: #{fourier_unit_forward.3} parent=35 // pred_check
              _
            $region38: #{fourier_unit_forward.3} parent=35 // pred_check_branch
              %183 = sbr.rel target = $region40
            $region39: #{fourier_unit_forward.3} parent=35 // pred_region
              // Predicated region
              $region52: #{fourier_unit_forward.3} parent=39 // pred_check
                _
              $region53: #{fourier_unit_forward.3} parent=39 // pred_check_branch
                %201 = sbr.rel (0) target = $region55
              $region54: #{fourier_unit_forward.3} parent=39 // pred_region
                loop: start=0, step=1, limit=1
                $region56: #{fourier_unit_forward.3} parent=54 // loop_pre_header
                  _
                $region57: #{fourier_unit_forward.3} parent=54 // loop_header
                  %s203 = sphi 0, %s207
                  %p204 = scmp.ge.s32.totalorder %s203, 1
                  %s208 = sphi %s179, %s179
                  %s209 = sphi %s175, %s175
                $region58: #{fourier_unit_forward.3} parent=54 // loop_header_branch
                  %206 = sbr.rel (%p204) target = $region62
                $region59: #{fourier_unit_forward.3} parent=54 // loop_body
                  _
                $region60: #{fourier_unit_forward.3} parent=54 // loop_footer
                  %s207 = sadd.s32 1, %s203
                $region61: #{fourier_unit_forward.3} parent=54 // loop_footer_branch
                  %202 = sbr.rel target = $region57
                $region62: #{fourier_unit_forward.3} parent=54 // loop_exit
                  _
                %s211 = ssub.s32 16, 1
                loop: start=0, step=1, limit=1
                $region63: #{fourier_unit_forward.3} parent=54 // loop_pre_header
                  _
                $region64: #{fourier_unit_forward.3} parent=54 // loop_header
                  %s213 = sphi 0, %s217
                  %p214 = scmp.ge.s32.totalorder %s213, 1
                  %s218 = sphi %s179, %s179
                  %s219 = sphi %s175, %s175
                $region65: #{fourier_unit_forward.3} parent=54 // loop_header_branch
                  %216 = sbr.rel (%p214) target = $region69
                $region66: #{fourier_unit_forward.3} parent=54 // loop_body
                  %v220 = vld [vmem:[%s218] sm:%s211]
                  %221 = vst [vmem:[%s219] sm:%s211] %v220
                  %v222 = vld [vmem:[%s218 + $0x8] sm:%s211]
                  %223 = vst [vmem:[%s219 + $0x4] sm:%s211] %v222
                $region67: #{fourier_unit_forward.3} parent=54 // loop_footer
                  %s217 = sadd.s32 1, %s213
                $region68: #{fourier_unit_forward.3} parent=54 // loop_footer_branch
                  %212 = sbr.rel target = $region64
                $region69: #{fourier_unit_forward.3} parent=54 // loop_exit
                  _
              $region55: #{fourier_unit_forward.3} parent=39 // pred_fallthru
                _
            $region40: #{fourier_unit_forward.3} parent=35 // pred_fallthru
              _
            // Predicated region
            $region41: #{fourier_unit_forward.3} parent=35 // pred_check
              _
            $region42: #{fourier_unit_forward.3} parent=35 // pred_check_branch
              %185 = sbr.rel (0) target = $region44
            $region43: #{fourier_unit_forward.3} parent=35 // pred_region
              %s187 = ssub.s32 16, 1
              loop: start=0, step=1, limit=1
              $region45: #{fourier_unit_forward.3} parent=43 // loop_pre_header
                _
              $region46: #{fourier_unit_forward.3} parent=43 // loop_header
                %s189 = sphi 0, %s193
                %p190 = scmp.ge.s32.totalorder %s189, 1
                %s194 = sphi %s179, %s179
                %s195 = sphi %s175, %s175
              $region47: #{fourier_unit_forward.3} parent=43 // loop_header_branch
                %192 = sbr.rel (%p190) target = $region51
              $region48: #{fourier_unit_forward.3} parent=43 // loop_body
                %v196 = vld [vmem:[%s194] sm:%s187]
                %197 = vst [vmem:[%s195] sm:%s187] %v196
                %v198 = vld [vmem:[%s194 + $0x8] sm:%s187]
                %199 = vst [vmem:[%s195 + $0x4] sm:%s187] %v198
              $region49: #{fourier_unit_forward.3} parent=43 // loop_footer
                %s193 = sadd.s32 1, %s189
              $region50: #{fourier_unit_forward.3} parent=43 // loop_footer_branch
                %188 = sbr.rel target = $region46
              $region51: #{fourier_unit_forward.3} parent=43 // loop_exit
                _
            $region44: #{fourier_unit_forward.3} parent=35 // pred_fallthru
              _
          $region36: #{fourier_unit_forward.3} parent=31 // pred_fallthru
            _
          %224 = vnop
        $region32: #{fourier_unit_forward.3} parent=27 // pred_fallthru
          _
      $region28: #{fourier_unit_forward.3} parent=5 // pred_fallthru
        _
      %p225 = scmp.le.s32.totalorder 1, %s10
      %p226 = scmp.lt.s32.totalorder %s10, 5
      %p227 = pnand %p225, %p226
      %p228 = pneg %p227
      // Predicated region
      $region70: #{fourier_unit_forward.3} parent=5 // pred_check
        _
      $region71: #{fourier_unit_forward.3} parent=5 // pred_check_branch
        %230 = sbr.rel (%p227) target = $region73
      $region72: #{fourier_unit_forward.3} parent=5 // pred_region
        %s231 = ssub.s32 %s10, 1
        %s232 = sand.u32 %s100, 1
        %s233 = sand.u32 %s100, 1
        %s234 = smul.addr %s233, 8
        %s235 = scalar_lea.vmem [#allocation2], %s234
        // Predicated region
        $region74: #{fourier_unit_forward.3} parent=72 // pred_check
          %p236 = pneg %p113
        $region75: #{fourier_unit_forward.3} parent=72 // pred_check_branch
          %238 = sbr.rel (%p236) target = $region77
        $region76: #{fourier_unit_forward.3} parent=72 // pred_region
          _
        $region77: #{fourier_unit_forward.3} parent=72 // pred_fallthru
          _
        %p239 = pneg %p43
        %p240 = pneg %p40
        %p241 = pneg %p64
        %p242 = pneg %p61
        %p243 = pneg %p85
        %p244 = pneg %p82
        %s245 = sand.u32 %s100, 1
        %s246 = sand.u32 %s100, 1
        %s247 = smul.addr %s246, 8
        %s248 = scalar_lea.vmem [#allocation2], %s247
        %p249 = pneg %p113
        %p250 = pneg %p110
        %p251 = pneg %p141
        %p252 = pneg %p138
        %p253 = scmp.lt.s32.totalorder %s19, 1
        %s254 = scalar_select %p253, %s19, 1
        %p255 = scmp.lt.s32.totalorder %s20, 1
        %s256 = scalar_select %p255, %s20, 1
        %s257 = smul.addr %s254, 2
        %s258 = sadd.s32 %s256, %s257
        %s259 = smul.addr %s258, 8
        %s260 = scalar_lea.vmem %s4, %s259
        %p261 = scmp.lt.s32.totalorder %s19, 1
        %s262 = scalar_select %p261, %s19, 1
        %p263 = scmp.lt.s32.totalorder %s20, 1
        %s264 = scalar_select %p263, %s20, 1
        %s265 = smul.addr %s262, 2
        %s266 = sadd.s32 %s264, %s265
        %s267 = smul.addr %s266, 8
        %s268 = scalar_lea.vmem %s4, %s267
        %v270 = vld [vmem:[%s0] sm:$0xf]
        %v271 = vld [vmem:[%s235] sm:$0xf]
        %v272 = vld [vmem:[%s235 + $0x4] sm:$0xf]
        %v275 = vunpack.c.l.b16 %v271
        %v276 = vunpack.c.l.b16 %v272
        %v277 = vpack.c.b16 %v276, %v275
        %vm279 = vcmask 130048
        %v281 = vsel %vm279, %v270, 0
        %283 = vmatprep.subr.bf16.mxu0 0
        %284 = vmatpush1.bf16.msra.mxu0 0
        %285 = vmatprep.subr.bf16.mxu0 0
        %286 = vmatpush1.bf16.msra.mxu0 0
        %287 = vmatprep.subr.bf16.mxu0 0
        %288 = vmatpush1.bf16.msra.mxu0 0
        %289 = vmatprep.subr.bf16.mxu0 0
        %290 = vmatpush1.bf16.msra.mxu0 0
        %291 = vmatprep.subr.bf16.mxu0 0
        %292 = vmatpush1.bf16.msra.mxu0 0
        %293 = vmatprep.subr.bf16.mxu0 0
        %294 = vmatpush1.bf16.msra.mxu0 0
        %295 = vmatprep.subr.bf16.mxu0 0
        %296 = vmatpush1.bf16.msra.mxu0 0
        %297 = vmatprep.subr.bf16.mxu0 0
        %298 = vmatpush1.bf16.msra.mxu0 %v277
        %299 = vmatprep.subr.bf16.mxu0 0
        %300 = vmatpush2.bf16.msra.mxu0 0
        %301 = vmatprep.subr.bf16.mxu0 0
        %302 = vmatpush2.bf16.msra.mxu0 0
        %303 = vmatprep.subr.bf16.mxu0 0
        %304 = vmatpush2.bf16.msra.mxu0 0
        %305 = vmatprep.subr.bf16.mxu0 0
        %306 = vmatpush2.bf16.msra.mxu0 0
        %307 = vmatprep.subr.bf16.mxu0 0
        %308 = vmatpush2.bf16.msra.mxu0 0
        %309 = vmatprep.subr.bf16.mxu0 0
        %310 = vmatpush2.bf16.msra.mxu0 0
        %311 = vmatprep.subr.bf16.mxu0 0
        %312 = vmatpush2.bf16.msra.mxu0 0
        %313 = vmatprep.subr.bf16.mxu0 0
        %314 = vmatpush2.bf16.msra.mxu0 0
        %315 = vmatprep.mubr.bf16.mxu0 0
        %316 = vmatmul.mubr.bf16.gmra.mxu0 %v281
        %v317 = vpop.f32.mrf.mxu0
        %v318 = vadd.f32 0.0, %v317
        %v319 = vpop.f32.mrf.mxu0
        %v320 = vpop.f32.mrf.mxu0
        %v321 = vpop.f32.mrf.mxu0
        %322 = vdwg.mxu0
        %v323 = vld [vmem:[%s1] sm:$0xff]
        %325 = vset.pattern.permute.xlu0 0
        %326 = vperm.xlu0 %325, %v323
        %v327 = vpop.permute.xlu0 %326
        %v329 = vmul.f32 %v318, %v327
        %v330 = vld [vmem:[%s2] sm:$0xff]
        %332 = vset.pattern.permute.xlu0 0
        %333 = vperm.xlu0 %332, %v330
        %v334 = vpop.permute.xlu0 %333
        %v336 = vadd.f32 %v329, %v334
        %v337 = vmax.f32 %v336, 0.0
        %338 = vst [vmem:[%s268] sm:$0xff] %v337
        %p339 = scmp.lt.s32.totalorder %s19, 1
        %s340 = scalar_select %p339, %s19, 1
        %p341 = scmp.lt.s32.totalorder %s20, 1
        %s342 = scalar_select %p341, %s20, 1
        %s343 = smul.addr %s340, 2
        %s344 = sadd.s32 %s342, %s343
        %s345 = smul.addr %s344, 8
        %s346 = scalar_lea.vmem %s4, %s345
        // Predicated region
        $region78: #{fourier_unit_forward.3} parent=72 // pred_check
          %p347 = pneg %p138
        $region79: #{fourier_unit_forward.3} parent=72 // pred_check_branch
          %349 = sbr.rel (%p347) target = $region81
        $region80: #{fourier_unit_forward.3} parent=72 // pred_region
          _
        $region81: #{fourier_unit_forward.3} parent=72 // pred_fallthru
          _
      $region73: #{fourier_unit_forward.3} parent=5 // pred_fallthru
        _
      %p350 = scmp.le.s32.totalorder 2, %s10
      // Predicated region
      $region82: #{fourier_unit_forward.3} parent=5 // pred_check
        %p351 = pneg %p350
      $region83: #{fourier_unit_forward.3} parent=5 // pred_check_branch
        %353 = sbr.rel (%p351) target = $region85
      $region84: #{fourier_unit_forward.3} parent=5 // pred_region
        %s354 = ssub.s32 %s10, 2
        // Predicated region
        $region86: #{fourier_unit_forward.3} parent=84 // pred_check
          %p355 = pneg %p144
        $region87: #{fourier_unit_forward.3} parent=84 // pred_check_branch
          %357 = sbr.rel (%p355) target = $region89
        $region88: #{fourier_unit_forward.3} parent=84 // pred_region
          %p358 = scmp.lt.s32.totalorder %s21, 1
          %s359 = scalar_select %p358, %s21, 1
          %p360 = scmp.lt.s32.totalorder %s22, 1
          %s361 = scalar_select %p360, %s22, 1
          %s362 = smul.addr %s359, 2
          %s363 = sadd.s32 %s361, %s362
          %s364 = smul.addr %s363, 8
          %s365 = scalar_lea.vmem %s4, %s364
        $region89: #{fourier_unit_forward.3} parent=84 // pred_fallthru
          _
      $region85: #{fourier_unit_forward.3} parent=5 // pred_fallthru
        _
    $region6: #{fourier_unit_forward.3} parent=1 // loop_footer
      %s14 = sadd.s32 1, %s10
    $region7: #{fourier_unit_forward.3} parent=1 // loop_footer_branch
      %9 = sbr.rel target = $region3
    $region8: #{fourier_unit_forward.3} parent=1 // loop_exit
      _

// kernel: fourier_unit_forward.2
$region0: #{fourier_unit_forward.2}
  #allocation0 [shape = 'u32[]', space=smem, size = 0x4, offset = 0x4, fixed_abs, tag = 'smem constant byte address 0x4 - core index']
  #allocation1 [shape = 'u32[144,128]{1,0:T(1,128)}', space=vmem, size = 0x12000, scoped, tag = 'internal scratch']
  %s0 = inlined_call_operand.vmem [shape: bf16[8,16], index: 0, kind: input, shape index: {}]
  %s1 = inlined_call_operand.vmem [shape: bf16[2,16,256], index: 1, kind: input, shape index: {}]
  %s2 = inlined_call_operand.vmem [shape: f32[2,2,8,2], index: 2, kind: output, shape index: {}]
  %s3 = sld [smem:[#allocation0]]
  $region86: #{fourier_unit_forward.2} parent=0
    _
  %s5 = ssub.s32 1, %s3
  %s6 = scalar_select 0, %s5, %s3
  $region1: #{fourier_unit_forward.2} parent=0
    #allocation2 [shape = 'u8[8192]{0}', space=vmem, size = 0x2000, scoped, tag = 'input window, operand 1']
    loop: start=0, step=1, limit=6
    $region2: #{fourier_unit_forward.2} parent=1 // loop_pre_header
      _
    $region3: #{fourier_unit_forward.2} parent=1 // loop_header
      %s8 = sphi 0, %s12
      %p9 = scmp.ge.s32.totalorder %s8, 6
      %s15 = sphi 0, %s34
      %s16 = sphi 0, %s30
      %s17 = sphi 0, %s26
      %s18 = sphi 0, %s15
      %s19 = sphi 0, %s16
      %s20 = sphi 0, %s17
      %s21 = sphi 0, %s18
      %s22 = sphi 0, %s19
      %s23 = sphi 0, %s20
      %s35 = sphi 0, %s35
      %s37 = sphi 0, %s35
      %s38 = sphi 0, %s37
      %s52 = sphi 0, %s38
      %s62 = sphi 0, %s64
      %s65 = sphi 0, %s62
      %s66 = sphi 0, %s65
      %s82 = sphi 0, %s66
      %s90 = sphi 0, %s92
      %s93 = sphi 0, %s90
      %s94 = sphi 0, %s93
      %s110 = sphi 0, %s94
    $region4: #{fourier_unit_forward.2} parent=1 // loop_header_branch
      %11 = sbr.rel (%p9) target = $region8
    $region5: #{fourier_unit_forward.2} parent=1 // loop_body
      %s13 = ssub.s32 %s8, 1
      %s14 = ssub.s32 %s8, 2
      %s24 = sadd.s32 1, %s17
      %p25 = scmp.ge.s32.totalorder %s24, 1
      %s26 = scalar_select %p25, 0, %s24
      %s27 = sadd.s32 1, %s16
      %s28 = scalar_select %p25, %s27, %s16
      %p29 = scmp.ge.s32.totalorder %s28, 2
      %s30 = scalar_select %p29, 0, %s28
      %s31 = sadd.s32 1, %s15
      %s32 = scalar_select %p29, %s31, %s15
      %p33 = scmp.ge.s32.totalorder %s32, 2
      %s34 = scalar_select %p33, 0, %s32
      %s36 = sadd.s32 %s35, 1
      %p39 = scmp.eq.s32.totalorder %s8, 3
      %p40 = scmp.ne.s32.totalorder %s35, %s37
      %p41 = scmp.eq.s32.totalorder %s8, 0
      %p42 = por %p40, %p41
      %p43 = scmp.ne.s32.totalorder %s35, %s37
      %p44 = scmp.eq.s32.totalorder %s13, 3
      %p45 = por %p43, %p44
      %p46 = scmp.ne.s32.totalorder %s37, %s38
      %p47 = scmp.eq.s32.totalorder %s13, 0
      %p48 = por %p46, %p47
      %p49 = scmp.ne.s32.totalorder %s37, %s38
      %p50 = scmp.eq.s32.totalorder %s14, 3
      %p51 = por %p49, %p50
      %p53 = scmp.ne.s32.totalorder %s38, %s52
      %p54 = scmp.eq.s32.totalorder %s14, 0
      %p55 = por %p53, %p54
      %s56 = sadd.s32 %s16, %s17
      %s57 = sadd.s32 %s30, %s26
      %s58 = ssub.s32 %s15, %s34
      %s59 = ssub.s32 %s56, %s57
      %s60 = sor.u32 %s58, %s59
      %p61 = scmp.eq.s32.totalorder %s60, 0
      %s63 = sadd.s32 %s62, 1
      %s64 = scalar_select %p61, %s62, %s63
      %p67 = pneg %p61
      %p68 = scmp.eq.s32.totalorder %s8, 3
      %p69 = por %p67, %p68
      %p70 = scmp.ne.s32.totalorder %s62, %s65
      %p71 = scmp.eq.s32.totalorder %s8, 0
      %p72 = por %p70, %p71
      %p73 = scmp.ne.s32.totalorder %s62, %s65
      %p74 = scmp.eq.s32.totalorder %s13, 3
      %p75 = por %p73, %p74
      %p76 = scmp.ne.s32.totalorder %s65, %s66
      %p77 = scmp.eq.s32.totalorder %s13, 0
      %p78 = por %p76, %p77
      %p79 = scmp.ne.s32.totalorder %s65, %s66
      %p80 = scmp.eq.s32.totalorder %s14, 3
      %p81 = por %p79, %p80
      %p83 = scmp.ne.s32.totalorder %s66, %s82
      %p84 = scmp.eq.s32.totalorder %s14, 0
      %p85 = por %p83, %p84
      %s86 = ssub.s32 %s15, %s34
      %s87 = ssub.s32 %s16, %s30
      %s88 = sor.u32 %s86, %s87
      %p89 = scmp.eq.s32.totalorder %s88, 0
      %s91 = sadd.s32 %s90, 1
      %s92 = scalar_select %p89, %s90, %s91
      %p95 = pneg %p89
      %p96 = scmp.eq.s32.totalorder %s8, 3
      %p97 = por %p95, %p96
      %p98 = scmp.ne.s32.totalorder %s90, %s93
      %p99 = scmp.eq.s32.totalorder %s8, 0
      %p100 = por %p98, %p99
      %p101 = scmp.ne.s32.totalorder %s90, %s93
      %p102 = scmp.eq.s32.totalorder %s13, 3
      %p103 = por %p101, %p102
      %p104 = scmp.ne.s32.totalorder %s93, %s94
      %p105 = scmp.eq.s32.totalorder %s13, 0
      %p106 = por %p104, %p105
      %p107 = scmp.ne.s32.totalorder %s93, %s94
      %p108 = scmp.eq.s32.totalorder %s14, 3
      %p109 = por %p107, %p108
      %p111 = scmp.ne.s32.totalorder %s94, %s110
      %p112 = scmp.eq.s32.totalorder %s14, 0
      %p113 = por %p111, %p112
      %p114 = scmp.le.s32.totalorder 1, %s8
      %p115 = scmp.lt.s32.totalorder %s8, 5
      %p116 = pnand %p114, %p115
      %p117 = pneg %p116
      // Predicated region
      $region9: #{fourier_unit_forward.2} parent=5 // pred_check
        _
      $region10: #{fourier_unit_forward.2} parent=5 // pred_check_branch
        %119 = sbr.rel (%p116) target = $region12
      $region11: #{fourier_unit_forward.2} parent=5 // pred_region
        %s120 = ssub.s32 %s8, 1
        // Predicated region
        $region13: #{fourier_unit_forward.2} parent=11 // pred_check
          %p121 = pneg %p48
        $region14: #{fourier_unit_forward.2} parent=11 // pred_check_branch
          %123 = sbr.rel (%p121) target = $region16
        $region15: #{fourier_unit_forward.2} parent=11 // pred_region
          _
        $region16: #{fourier_unit_forward.2} parent=11 // pred_fallthru
          _
      $region12: #{fourier_unit_forward.2} parent=5 // pred_fallthru
        _
      %p124 = scmp.lt.s32.totalorder %s8, 4
      // Predicated region
      $region17: #{fourier_unit_forward.2} parent=5 // pred_check
        %p125 = pneg %p124
      $region18: #{fourier_unit_forward.2} parent=5 // pred_check_branch
        %127 = sbr.rel (%p125) target = $region20
      $region19: #{fourier_unit_forward.2} parent=5 // pred_region
        // Predicated region
        $region21: #{fourier_unit_forward.2} parent=19 // pred_check
          %p128 = pneg %p72
        $region22: #{fourier_unit_forward.2} parent=19 // pred_check_branch
          %130 = sbr.rel (%p128) target = $region24
        $region23: #{fourier_unit_forward.2} parent=19 // pred_region
          %s131 = sand.u32 %s62, 1
          %s132 = sand.u32 %s62, 1
          %s133 = smul.addr %s132, 8
          %s134 = scalar_lea.vmem [#allocation2], %s133
          %s135 = sadd.s32 %s16, %s17
          %s136 = smul.addr %s15, 4
          %s137 = sadd.s32 %s135, %s136
          %s138 = smul.addr %s137, 4
          %s139 = scalar_lea.vmem %s1, %s138
          // Predicated region
          $region25: #{fourier_unit_forward.2} parent=23 // pred_check
            _
          $region26: #{fourier_unit_forward.2} parent=23 // pred_check_branch
            %141 = sbr.rel (0) target = $region28
          $region27: #{fourier_unit_forward.2} parent=23 // pred_region
            // Predicated region
            $region29: #{fourier_unit_forward.2} parent=27 // pred_check
              _
            $region30: #{fourier_unit_forward.2} parent=27 // pred_check_branch
              %143 = sbr.rel target = $region32
            $region31: #{fourier_unit_forward.2} parent=27 // pred_region
              // Predicated region
              $region44: #{fourier_unit_forward.2} parent=31 // pred_check
                _
              $region45: #{fourier_unit_forward.2} parent=31 // pred_check_branch
                %161 = sbr.rel (0) target = $region47
              $region46: #{fourier_unit_forward.2} parent=31 // pred_region
                loop: start=0, step=1, limit=1
                $region48: #{fourier_unit_forward.2} parent=46 // loop_pre_header
                  _
                $region49: #{fourier_unit_forward.2} parent=46 // loop_header
                  %s163 = sphi 0, %s167
                  %p164 = scmp.ge.s32.totalorder %s163, 1
                  %s168 = sphi %s139, %s139
                  %s169 = sphi %s134, %s134
                $region50: #{fourier_unit_forward.2} parent=46 // loop_header_branch
                  %166 = sbr.rel (%p164) target = $region54
                $region51: #{fourier_unit_forward.2} parent=46 // loop_body
                  _
                $region52: #{fourier_unit_forward.2} parent=46 // loop_footer
                  %s167 = sadd.s32 1, %s163
                $region53: #{fourier_unit_forward.2} parent=46 // loop_footer_branch
                  %162 = sbr.rel target = $region49
                $region54: #{fourier_unit_forward.2} parent=46 // loop_exit
                  _
                %s171 = ssub.s32 16, 1
                loop: start=0, step=1, limit=1
                $region55: #{fourier_unit_forward.2} parent=46 // loop_pre_header
                  _
                $region56: #{fourier_unit_forward.2} parent=46 // loop_header
                  %s173 = sphi 0, %s177
                  %p174 = scmp.ge.s32.totalorder %s173, 1
                  %s178 = sphi %s139, %s139
                  %s179 = sphi %s134, %s134
                $region57: #{fourier_unit_forward.2} parent=46 // loop_header_branch
                  %176 = sbr.rel (%p174) target = $region61
                $region58: #{fourier_unit_forward.2} parent=46 // loop_body
                  %v180 = vld [vmem:[%s178] sm:%s171]
                  %181 = vst [vmem:[%s179] sm:%s171] %v180
                  %v182 = vld [vmem:[%s178 + $0x8] sm:%s171]
                  %183 = vst [vmem:[%s179 + $0x4] sm:%s171] %v182
                $region59: #{fourier_unit_forward.2} parent=46 // loop_footer
                  %s177 = sadd.s32 1, %s173
                $region60: #{fourier_unit_forward.2} parent=46 // loop_footer_branch
                  %172 = sbr.rel target = $region56
                $region61: #{fourier_unit_forward.2} parent=46 // loop_exit
                  _
              $region47: #{fourier_unit_forward.2} parent=31 // pred_fallthru
                _
            $region32: #{fourier_unit_forward.2} parent=27 // pred_fallthru
              _
            // Predicated region
            $region33: #{fourier_unit_forward.2} parent=27 // pred_check
              _
            $region34: #{fourier_unit_forward.2} parent=27 // pred_check_branch
              %145 = sbr.rel (0) target = $region36
            $region35: #{fourier_unit_forward.2} parent=27 // pred_region
              %s147 = ssub.s32 16, 1
              loop: start=0, step=1, limit=1
              $region37: #{fourier_unit_forward.2} parent=35 // loop_pre_header
                _
              $region38: #{fourier_unit_forward.2} parent=35 // loop_header
                %s149 = sphi 0, %s153
                %p150 = scmp.ge.s32.totalorder %s149, 1
                %s154 = sphi %s139, %s139
                %s155 = sphi %s134, %s134
              $region39: #{fourier_unit_forward.2} parent=35 // loop_header_branch
                %152 = sbr.rel (%p150) target = $region43
              $region40: #{fourier_unit_forward.2} parent=35 // loop_body
                %v156 = vld [vmem:[%s154] sm:%s147]
                %157 = vst [vmem:[%s155] sm:%s147] %v156
                %v158 = vld [vmem:[%s154 + $0x8] sm:%s147]
                %159 = vst [vmem:[%s155 + $0x4] sm:%s147] %v158
              $region41: #{fourier_unit_forward.2} parent=35 // loop_footer
                %s153 = sadd.s32 1, %s149
              $region42: #{fourier_unit_forward.2} parent=35 // loop_footer_branch
                %148 = sbr.rel target = $region38
              $region43: #{fourier_unit_forward.2} parent=35 // loop_exit
                _
            $region36: #{fourier_unit_forward.2} parent=27 // pred_fallthru
              _
          $region28: #{fourier_unit_forward.2} parent=23 // pred_fallthru
            _
          %184 = vnop
        $region24: #{fourier_unit_forward.2} parent=19 // pred_fallthru
          _
      $region20: #{fourier_unit_forward.2} parent=5 // pred_fallthru
        _
      %p185 = scmp.le.s32.totalorder 1, %s8
      %p186 = scmp.lt.s32.totalorder %s8, 5
      %p187 = pnand %p185, %p186
      %p188 = pneg %p187
      // Predicated region
      $region62: #{fourier_unit_forward.2} parent=5 // pred_check
        _
      $region63: #{fourier_unit_forward.2} parent=5 // pred_check_branch
        %190 = sbr.rel (%p187) target = $region65
      $region64: #{fourier_unit_forward.2} parent=5 // pred_region
        %s191 = ssub.s32 %s8, 1
        %s192 = sand.u32 %s65, 1
        %s193 = sand.u32 %s65, 1
        %s194 = smul.addr %s193, 8
        %s195 = scalar_lea.vmem [#allocation2], %s194
        // Predicated region
        $region66: #{fourier_unit_forward.2} parent=64 // pred_check
          %p196 = pneg %p78
        $region67: #{fourier_unit_forward.2} parent=64 // pred_check_branch
          %198 = sbr.rel (%p196) target = $region69
        $region68: #{fourier_unit_forward.2} parent=64 // pred_region
          _
        $region69: #{fourier_unit_forward.2} parent=64 // pred_fallthru
          _
        %p199 = pneg %p48
        %p200 = pneg %p45
        %s201 = sand.u32 %s65, 1
        %s202 = sand.u32 %s65, 1
        %s203 = smul.addr %s202, 8
        %s204 = scalar_lea.vmem [#allocation2], %s203
        %p205 = pneg %p78
        %p206 = pneg %p75
        %p207 = pneg %p106
        %p208 = pneg %p103
        %p209 = scmp.lt.s32.totalorder %s18, 1
        %s210 = scalar_select %p209, %s18, 1
        %p211 = scmp.lt.s32.totalorder %s19, 1
        %s212 = scalar_select %p211, %s19, 1
        %s213 = smul.addr %s210, 2
        %s214 = sadd.s32 %s212, %s213
        %s215 = smul.addr %s214, 8
        %s216 = scalar_lea.vmem %s2, %s215
        %s217 = sadd.s32 %s19, %s20
        %p218 = scmp.lt.s32.totalorder %s18, 1
        %s219 = scalar_select %p218, %s18, 1
        %p220 = scmp.lt.s32.totalorder %s19, 1
        %s221 = scalar_select %p220, %s19, 1
        %s222 = smul.addr %s219, 2
        %s223 = sadd.s32 %s221, %s222
        %s224 = smul.addr %s223, 8
        %s225 = scalar_lea.vmem %s2, %s224
        %p227 = scmp.eq.s32.totalorder %s20, 0
        // Predicated region
        $region70: #{fourier_unit_forward.2} parent=64 // pred_check
          %p228 = pneg %p227
        $region71: #{fourier_unit_forward.2} parent=64 // pred_check_branch
          %230 = sbr.rel (%p228) target = $region73
        $region72: #{fourier_unit_forward.2} parent=64 // pred_region
          %vm231 = vcmask 15360
          %232 = vst.msk [vmem:[%s225] sm:$0xff] %vm231, 0.0
        $region73: #{fourier_unit_forward.2} parent=64 // pred_fallthru
          _
        %v233 = vld [vmem:[%s0] sm:$0xf]
        %v234 = vld [vmem:[%s195] sm:$0xf]
        %v235 = vld [vmem:[%s195 + $0x4] sm:$0xf]
        %v238 = vunpack.c.l.b16 %v234
        %v239 = vunpack.c.l.b16 %v235
        %v240 = vpack.c.b16 %v239, %v238
        %vm242 = vcmask 130048
        %v244 = vsel %vm242, %v233, 0
        %246 = vmatprep.subr.bf16.mxu0 0
        %247 = vmatpush1.bf16.msra.mxu0 0
        %248 = vmatprep.subr.bf16.mxu0 0
        %249 = vmatpush1.bf16.msra.mxu0 0
        %250 = vmatprep.subr.bf16.mxu0 0
        %251 = vmatpush1.bf16.msra.mxu0 0
        %252 = vmatprep.subr.bf16.mxu0 0
        %253 = vmatpush1.bf16.msra.mxu0 0
        %254 = vmatprep.subr.bf16.mxu0 0
        %255 = vmatpush1.bf16.msra.mxu0 0
        %256 = vmatprep.subr.bf16.mxu0 0
        %257 = vmatpush1.bf16.msra.mxu0 0
        %258 = vmatprep.subr.bf16.mxu0 0
        %259 = vmatpush1.bf16.msra.mxu0 0
        %260 = vmatprep.subr.bf16.mxu0 0
        %261 = vmatpush1.bf16.msra.mxu0 %v240
        %262 = vmatprep.subr.bf16.mxu0 0
        %263 = vmatpush2.bf16.msra.mxu0 0
        %264 = vmatprep.subr.bf16.mxu0 0
        %265 = vmatpush2.bf16.msra.mxu0 0
        %266 = vmatprep.subr.bf16.mxu0 0
        %267 = vmatpush2.bf16.msra.mxu0 0
        %268 = vmatprep.subr.bf16.mxu0 0
        %269 = vmatpush2.bf16.msra.mxu0 0
        %270 = vmatprep.subr.bf16.mxu0 0
        %271 = vmatpush2.bf16.msra.mxu0 0
        %272 = vmatprep.subr.bf16.mxu0 0
        %273 = vmatpush2.bf16.msra.mxu0 0
        %274 = vmatprep.subr.bf16.mxu0 0
        %275 = vmatpush2.bf16.msra.mxu0 0
        %276 = vmatprep.subr.bf16.mxu0 0
        %277 = vmatpush2.bf16.msra.mxu0 0
        %278 = vmatprep.mubr.bf16.mxu0 0
        %279 = vmatmul.mubr.bf16.gmra.mxu0 %v244
        %v280 = vpop.f32.mrf.mxu0
        %v281 = vadd.f32 0.0, %v280
        %v282 = vpop.f32.mrf.mxu0
        %v283 = vpop.f32.mrf.mxu0
        %v284 = vpop.f32.mrf.mxu0
        %285 = vdwg.mxu0
        %286 = vadd.xlane.f32.xlu0 %v281
        %v287 = vpop.xlane.xlu0 %286
        %v288 = vmul.f32 %v281, %v281
        %289 = vadd.xlane.f32.xlu0 %v288
        %v290 = vpop.xlane.xlu0 %289
        %v291 = vld [vmem:[%s225] sm:$0xff]
        %vm292 = vcmask 7168
        %v293 = vsel %vm292, %v287, %v290
        %v294 = vadd.f32 %v291, %v293
        %vm295 = vcmask 15360
        %296 = vst.msk [vmem:[%s225] sm:$0xff] %vm295, %v294
        %p297 = scmp.lt.s32.totalorder %s18, 1
        %s298 = scalar_select %p297, %s18, 1
        %p299 = scmp.lt.s32.totalorder %s19, 1
        %s300 = scalar_select %p299, %s19, 1
        %s301 = smul.addr %s298, 2
        %s302 = sadd.s32 %s300, %s301
        %s303 = smul.addr %s302, 8
        %s304 = scalar_lea.vmem %s2, %s303
        // Predicated region
        $region74: #{fourier_unit_forward.2} parent=64 // pred_check
          %p305 = pneg %p103
        $region75: #{fourier_unit_forward.2} parent=64 // pred_check_branch
          %307 = sbr.rel (%p305) target = $region77
        $region76: #{fourier_unit_forward.2} parent=64 // pred_region
          _
        $region77: #{fourier_unit_forward.2} parent=64 // pred_fallthru
          _
      $region65: #{fourier_unit_forward.2} parent=5 // pred_fallthru
        _
      %p308 = scmp.le.s32.totalorder 2, %s8
      // Predicated region
      $region78: #{fourier_unit_forward.2} parent=5 // pred_check
        %p309 = pneg %p308
      $region79: #{fourier_unit_forward.2} parent=5 // pred_check_branch
        %311 = sbr.rel (%p309) target = $region81
      $region80: #{fourier_unit_forward.2} parent=5 // pred_region
        %s312 = ssub.s32 %s8, 2
        // Predicated region
        $region82: #{fourier_unit_forward.2} parent=80 // pred_check
          %p313 = pneg %p109
        $region83: #{fourier_unit_forward.2} parent=80 // pred_check_branch
          %315 = sbr.rel (%p313) target = $region85
        $region84: #{fourier_unit_forward.2} parent=80 // pred_region
          %p316 = scmp.lt.s32.totalorder %s21, 1
          %s317 = scalar_select %p316, %s21, 1
          %p318 = scmp.lt.s32.totalorder %s22, 1
          %s319 = scalar_select %p318, %s22, 1
          %s320 = smul.addr %s317, 2
          %s321 = sadd.s32 %s319, %s320
          %s322 = smul.addr %s321, 8
          %s323 = scalar_lea.vmem %s2, %s322
        $region85: #{fourier_unit_forward.2} parent=80 // pred_fallthru
          _
      $region81: #{fourier_unit_forward.2} parent=5 // pred_fallthru
        _
    $region6: #{fourier_unit_forward.2} parent=1 // loop_footer
      %s12 = sadd.s32 1, %s8
    $region7: #{fourier_unit_forward.2} parent=1 // loop_footer_branch
      %7 = sbr.rel target = $region3
    $region8: #{fourier_unit_forward.2} parent=1 // loop_exit
      _

// kernel: reverse.0
$region0: #{reverse.0}
  %s0 = inlined_call_operand.vmem [shape: f32[2,4,16,7], index: 0, kind: input, shape index: {}]
  %s1 = inlined_call_operand.vmem [shape: f32[2,4,16,7], index: 1, kind: output, shape index: {}]
  $region1: #{reverse.0} parent=0
    #allocation0 [shape = 'u8[65536]{0}', space=vmem, size = 0x10000, scoped, tag = 'operand span for operand 0']
    #allocation1 [shape = 'u8[32768]{0}', space=vmem, size = 0x8000, scoped, tag = 'operand span for operand 1']
    %s2 = scalar_lea.vmem [#allocation0], 8
    // Predicated region
    $region2: #{reverse.0} parent=1 // pred_check
      _
    $region3: #{reverse.0} parent=1 // pred_check_branch
      %4 = sbr.rel (0) target = $region5
    $region4: #{reverse.0} parent=1 // pred_region
      // Predicated region
      $region6: #{reverse.0} parent=4 // pred_check
        _
      $region7: #{reverse.0} parent=4 // pred_check_branch
        %6 = sbr.rel (0) target = $region9
      $region8: #{reverse.0} parent=4 // pred_region
        // Predicated region
        $region21: #{reverse.0} parent=8 // pred_check
          _
        $region22: #{reverse.0} parent=8 // pred_check_branch
          %36 = sbr.rel (0) target = $region24
        $region23: #{reverse.0} parent=8 // pred_region
          loop: start=0, step=1, limit=1
          $region25: #{reverse.0} parent=23 // loop_pre_header
            _
          $region26: #{reverse.0} parent=23 // loop_header
            %s38 = sphi 0, %s42
            %p39 = scmp.ge.s32.totalorder %s38, 1
            %s43 = sphi %s0, %s0
            %s44 = sphi %s2, %s2
          $region27: #{reverse.0} parent=23 // loop_header_branch
            %41 = sbr.rel (%p39) target = $region31
          $region28: #{reverse.0} parent=23 // loop_body
            %v45 = vld [vmem:[%s43] sm:$0xff]
            %46 = vst [vmem:[%s44] sm:$0xff] %v45
            %v47 = vld [vmem:[%s43 + $0x8] sm:$0xff]
            %48 = vst [vmem:[%s44 + $0x10] sm:$0xff] %v47
            %v49 = vld [vmem:[%s43 + $0x10] sm:$0xff]
            %50 = vst [vmem:[%s44 + $0x20] sm:$0xff] %v49
            %v51 = vld [vmem:[%s43 + $0x18] sm:$0xff]
            %52 = vst [vmem:[%s44 + $0x30] sm:$0xff] %v51
            %v53 = vld [vmem:[%s43 + $0x20] sm:$0xff]
            %54 = vst [vmem:[%s44 + $0x40] sm:$0xff] %v53
            %v55 = vld [vmem:[%s43 + $0x28] sm:$0xff]
            %56 = vst [vmem:[%s44 + $0x50] sm:$0xff] %v55
            %v57 = vld [vmem:[%s43 + $0x30] sm:$0xff]
            %58 = vst [vmem:[%s44 + $0x60] sm:$0xff] %v57
            %v59 = vld [vmem:[%s43 + $0x38] sm:$0xff]
            %60 = vst [vmem:[%s44 + $0x70] sm:$0xff] %v59
          $region29: #{reverse.0} parent=23 // loop_footer
            %s42 = sadd.s32 1, %s38
          $region30: #{reverse.0} parent=23 // loop_footer_branch
            %37 = sbr.rel target = $region26
          $region31: #{reverse.0} parent=23 // loop_exit
            _
        $region24: #{reverse.0} parent=8 // pred_fallthru
          _
        // Predicated region
        $region32: #{reverse.0} parent=8 // pred_check
          _
        $region33: #{reverse.0} parent=8 // pred_check_branch
          %62 = sbr.rel target = $region35
        $region34: #{reverse.0} parent=8 // pred_region
          _
        $region35: #{reverse.0} parent=8 // pred_fallthru
          _
      $region9: #{reverse.0} parent=4 // pred_fallthru
        _
      // Predicated region
      $region10: #{reverse.0} parent=4 // pred_check
        _
      $region11: #{reverse.0} parent=4 // pred_check_branch
        %8 = sbr.rel target = $region13
      $region12: #{reverse.0} parent=4 // pred_region
        %s10 = ssub.s32 256, 1
        loop: start=0, step=1, limit=1
        $region14: #{reverse.0} parent=12 // loop_pre_header
          _
        $region15: #{reverse.0} parent=12 // loop_header
          %s12 = sphi 0, %s16
          %p13 = scmp.ge.s32.totalorder %s12, 1
          %s17 = sphi %s0, %s0
          %s18 = sphi %s2, %s2
        $region16: #{reverse.0} parent=12 // loop_header_branch
          %15 = sbr.rel (%p13) target = $region20
        $region17: #{reverse.0} parent=12 // loop_body
          %v19 = vld [vmem:[%s17] sm:%s10]
          %20 = vst [vmem:[%s18] sm:%s10] %v19
          %v21 = vld [vmem:[%s17 + $0x8] sm:%s10]
          %22 = vst [vmem:[%s18 + $0x10] sm:%s10] %v21
          %v23 = vld [vmem:[%s17 + $0x10] sm:%s10]
          %24 = vst [vmem:[%s18 + $0x20] sm:%s10] %v23
          %v25 = vld [vmem:[%s17 + $0x18] sm:%s10]
          %26 = vst [vmem:[%s18 + $0x30] sm:%s10] %v25
          %v27 = vld [vmem:[%s17 + $0x20] sm:%s10]
          %28 = vst [vmem:[%s18 + $0x40] sm:%s10] %v27
          %v29 = vld [vmem:[%s17 + $0x28] sm:%s10]
          %30 = vst [vmem:[%s18 + $0x50] sm:%s10] %v29
          %v31 = vld [vmem:[%s17 + $0x30] sm:%s10]
          %32 = vst [vmem:[%s18 + $0x60] sm:%s10] %v31
          %v33 = vld [vmem:[%s17 + $0x38] sm:%s10]
          %34 = vst [vmem:[%s18 + $0x70] sm:%s10] %v33
        $region18: #{reverse.0} parent=12 // loop_footer
          %s16 = sadd.s32 1, %s12
        $region19: #{reverse.0} parent=12 // loop_footer_branch
          %11 = sbr.rel target = $region15
        $region20: #{reverse.0} parent=12 // loop_exit
          _
      $region13: #{reverse.0} parent=4 // pred_fallthru
        _
    $region5: #{reverse.0} parent=1 // pred_fallthru
      _
    %63 = vnop
    %s64 = scalar_lea.vmem [#allocation0], 7
    %v65 = vld [vmem:[%s64] ss:$-1 sm:$0xff]
    %v66 = vrot.slane %v65, 1
    %67 = vst [vmem:[#allocation1] sm:$0xff] %v66
    %s68 = scalar_lea.vmem [#allocation0], 8
    %s69 = scalar_lea.vmem %s68, 7 [#allocation0]
    %v70 = vld [vmem:[%s69] ss:$-1 sm:$0xff]
    %v71 = vrot.slane %v70, 1
    %v72 = vlaneseq
    %v73 = vshrl.u32 %v72, 7
    %vm74 = vcmp.lt.s32.totalorder %v73, 7
    %75 = vst.msk [vmem:[#allocation1] sm:$0xff] %vm74, %v71
    %s76 = scalar_lea.vmem [#allocation1], 8
    %s77 = scalar_lea.vmem [#allocation0], 16
    %s78 = scalar_lea.vmem %s77, 7 [#allocation0]
    %v79 = vld [vmem:[%s78] ss:$-1 sm:$0xff]
    %v80 = vrot.slane %v79, 1
    %81 = vst [vmem:[%s76] sm:$0xff] %v80
    %s82 = scalar_lea.vmem %s77, 8 [#allocation0]
    %s83 = scalar_lea.vmem %s82, 7 [#allocation0]
    %v84 = vld [vmem:[%s83] ss:$-1 sm:$0xff]
    %v85 = vrot.slane %v84, 1
    %v86 = vlaneseq
    %v87 = vshrl.u32 %v86, 7
    %vm88 = vcmp.lt.s32.totalorder %v87, 7
    %89 = vst.msk [vmem:[%s76] sm:$0xff] %vm88, %v85
    %s90 = scalar_lea.vmem [#allocation1], 16
    %s91 = scalar_lea.vmem [#allocation0], 32
    %s92 = scalar_lea.vmem %s91, 7 [#allocation0]
    %v93 = vld [vmem:[%s92] ss:$-1 sm:$0xff]
    %v94 = vrot.slane %v93, 1
    %95 = vst [vmem:[%s90] sm:$0xff] %v94
    %s96 = scalar_lea.vmem %s91, 8 [#allocation0]
    %s97 = scalar_lea.vmem %s96, 7 [#allocation0]
    %v98 = vld [vmem:[%s97] ss:$-1 sm:$0xff]
    %v99 = vrot.slane %v98, 1
    %v100 = vlaneseq
    %v101 = vshrl.u32 %v100, 7
    %vm102 = vcmp.lt.s32.totalorder %v101, 7
    %103 = vst.msk [vmem:[%s90] sm:$0xff] %vm102, %v99
    %s104 = scalar_lea.vmem [#allocation1], 24
    %s105 = scalar_lea.vmem [#allocation0], 48
    %s106 = scalar_lea.vmem %s105, 7 [#allocation0]
    %v107 = vld [vmem:[%s106] ss:$-1 sm:$0xff]
    %v108 = vrot.slane %v107, 1
    %109 = vst [vmem:[%s104] sm:$0xff] %v108
    %s110 = scalar_lea.vmem %s105, 8 [#allocation0]
    %s111 = scalar_lea.vmem %s110, 7 [#allocation0]
    %v112 = vld [vmem:[%s111] ss:$-1 sm:$0xff]
    %v113 = vrot.slane %v112, 1
    %v114 = vlaneseq
    %v115 = vshrl.u32 %v114, 7
    %vm116 = vcmp.lt.s32.totalorder %v115, 7
    %117 = vst.msk [vmem:[%s104] sm:$0xff] %vm116, %v113
    %s118 = scalar_lea.vmem [#allocation1], 32
    %s119 = scalar_lea.vmem [#allocation0], 64
    %s120 = scalar_lea.vmem %s119, 7 [#allocation0]
    %v121 = vld [vmem:[%s120] ss:$-1 sm:$0xff]
    %v122 = vrot.slane %v121, 1
    %123 = vst [vmem:[%s118] sm:$0xff] %v122
    %s124 = scalar_lea.vmem %s119, 8 [#allocation0]
    %s125 = scalar_lea.vmem %s124, 7 [#allocation0]
    %v126 = vld [vmem:[%s125] ss:$-1 sm:$0xff]
    %v127 = vrot.slane %v126, 1
    %v128 = vlaneseq
    %v129 = vshrl.u32 %v128, 7
    %vm130 = vcmp.lt.s32.totalorder %v129, 7
    %131 = vst.msk [vmem:[%s118] sm:$0xff] %vm130, %v127
    %s132 = scalar_lea.vmem [#allocation1], 40
    %s133 = scalar_lea.vmem [#allocation0], 80
    %s134 = scalar_lea.vmem %s133, 7 [#allocation0]
    %v135 = vld [vmem:[%s134] ss:$-1 sm:$0xff]
    %v136 = vrot.slane %v135, 1
    %137 = vst [vmem:[%s132] sm:$0xff] %v136
    %s138 = scalar_lea.vmem %s133, 8 [#allocation0]
    %s139 = scalar_lea.vmem %s138, 7 [#allocation0]
    %v140 = vld [vmem:[%s139] ss:$-1 sm:$0xff]
    %v141 = vrot.slane %v140, 1
    %v142 = vlaneseq
    %v143 = vshrl.u32 %v142, 7
    %vm144 = vcmp.lt.s32.totalorder %v143, 7
    %145 = vst.msk [vmem:[%s132] sm:$0xff] %vm144, %v141
    %s146 = scalar_lea.vmem [#allocation1], 48
    %s147 = scalar_lea.vmem [#allocation0], 96
    %s148 = scalar_lea.vmem %s147, 7 [#allocation0]
    %v149 = vld [vmem:[%s148] ss:$-1 sm:$0xff]
    %v150 = vrot.slane %v149, 1
    %151 = vst [vmem:[%s146] sm:$0xff] %v150
    %s152 = scalar_lea.vmem %s147, 8 [#allocation0]
    %s153 = scalar_lea.vmem %s152, 7 [#allocation0]
    %v154 = vld [vmem:[%s153] ss:$-1 sm:$0xff]
    %v155 = vrot.slane %v154, 1
    %v156 = vlaneseq
    %v157 = vshrl.u32 %v156, 7
    %vm158 = vcmp.lt.s32.totalorder %v157, 7
    %159 = vst.msk [vmem:[%s146] sm:$0xff] %vm158, %v155
    %s160 = scalar_lea.vmem [#allocation1], 56
    %s161 = scalar_lea.vmem [#allocation0], 112
    %s162 = scalar_lea.vmem %s161, 7 [#allocation0]
    %v163 = vld [vmem:[%s162] ss:$-1 sm:$0xff]
    %v164 = vrot.slane %v163, 1
    %165 = vst [vmem:[%s160] sm:$0xff] %v164
    %s166 = scalar_lea.vmem %s161, 8 [#allocation0]
    %s167 = scalar_lea.vmem %s166, 7 [#allocation0]
    %v168 = vld [vmem:[%s167] ss:$-1 sm:$0xff]
    %v169 = vrot.slane %v168, 1
    %v170 = vlaneseq
    %v171 = vshrl.u32 %v170, 7
    %vm172 = vcmp.lt.s32.totalorder %v171, 7
    %173 = vst.msk [vmem:[%s160] sm:$0xff] %vm172, %v169
    // Predicated region
    $region36: #{reverse.0} parent=1 // pred_check
      _
    $region37: #{reverse.0} parent=1 // pred_check_branch
      %175 = sbr.rel (0) target = $region39
    $region38: #{reverse.0} parent=1 // pred_region
      // Predicated region
      $region40: #{reverse.0} parent=38 // pred_check
        _
      $region41: #{reverse.0} parent=38 // pred_check_branch
        %177 = sbr.rel (0) target = $region43
      $region42: #{reverse.0} parent=38 // pred_region
        // Predicated region
        $region55: #{reverse.0} parent=42 // pred_check
          _
        $region56: #{reverse.0} parent=42 // pred_check_branch
          %207 = sbr.rel (0) target = $region58
        $region57: #{reverse.0} parent=42 // pred_region
          loop: start=0, step=1, limit=1
          $region59: #{reverse.0} parent=57 // loop_pre_header
            _
          $region60: #{reverse.0} parent=57 // loop_header
            %s209 = sphi 0, %s213
            %p210 = scmp.ge.s32.totalorder %s209, 1
            %s214 = sphi [#allocation1], [#allocation1]
            %s215 = sphi %s1, %s1
          $region61: #{reverse.0} parent=57 // loop_header_branch
            %212 = sbr.rel (%p210) target = $region65
          $region62: #{reverse.0} parent=57 // loop_body
            %v216 = vld [vmem:[%s214] sm:$0xff]
            %217 = vst [vmem:[%s215] sm:$0xff] %v216
            %v218 = vld [vmem:[%s214 + $0x8] sm:$0xff]
            %219 = vst [vmem:[%s215 + $0x8] sm:$0xff] %v218
            %v220 = vld [vmem:[%s214 + $0x10] sm:$0xff]
            %221 = vst [vmem:[%s215 + $0x10] sm:$0xff] %v220
            %v222 = vld [vmem:[%s214 + $0x18] sm:$0xff]
            %223 = vst [vmem:[%s215 + $0x18] sm:$0xff] %v222
            %v224 = vld [vmem:[%s214 + $0x20] sm:$0xff]
            %225 = vst [vmem:[%s215 + $0x20] sm:$0xff] %v224
            %v226 = vld [vmem:[%s214 + $0x28] sm:$0xff]
            %227 = vst [vmem:[%s215 + $0x28] sm:$0xff] %v226
            %v228 = vld [vmem:[%s214 + $0x30] sm:$0xff]
            %229 = vst [vmem:[%s215 + $0x30] sm:$0xff] %v228
            %v230 = vld [vmem:[%s214 + $0x38] sm:$0xff]
            %231 = vst [vmem:[%s215 + $0x38] sm:$0xff] %v230
          $region63: #{reverse.0} parent=57 // loop_footer
            %s213 = sadd.s32 1, %s209
          $region64: #{reverse.0} parent=57 // loop_footer_branch
            %208 = sbr.rel target = $region60
          $region65: #{reverse.0} parent=57 // loop_exit
            _
        $region58: #{reverse.0} parent=42 // pred_fallthru
          _
        // Predicated region
        $region66: #{reverse.0} parent=42 // pred_check
          _
        $region67: #{reverse.0} parent=42 // pred_check_branch
          %233 = sbr.rel target = $region69
        $region68: #{reverse.0} parent=42 // pred_region
          _
        $region69: #{reverse.0} parent=42 // pred_fallthru
          _
      $region43: #{reverse.0} parent=38 // pred_fallthru
        _
      // Predicated region
      $region44: #{reverse.0} parent=38 // pred_check
        _
      $region45: #{reverse.0} parent=38 // pred_check_branch
        %179 = sbr.rel target = $region47
      $region46: #{reverse.0} parent=38 // pred_region
        %s181 = ssub.s32 256, 1
        loop: start=0, step=1, limit=1
        $region48: #{reverse.0} parent=46 // loop_pre_header
          _
        $region49: #{reverse.0} parent=46 // loop_header
          %s183 = sphi 0, %s187
          %p184 = scmp.ge.s32.totalorder %s183, 1
          %s188 = sphi [#allocation1], [#allocation1]
          %s189 = sphi %s1, %s1
        $region50: #{reverse.0} parent=46 // loop_header_branch
          %186 = sbr.rel (%p184) target = $region54
        $region51: #{reverse.0} parent=46 // loop_body
          %v190 = vld [vmem:[%s188] sm:%s181]
          %191 = vst [vmem:[%s189] sm:%s181] %v190
          %v192 = vld [vmem:[%s188 + $0x8] sm:%s181]
          %193 = vst [vmem:[%s189 + $0x8] sm:%s181] %v192
          %v194 = vld [vmem:[%s188 + $0x10] sm:%s181]
          %195 = vst [vmem:[%s189 + $0x10] sm:%s181] %v194
          %v196 = vld [vmem:[%s188 + $0x18] sm:%s181]
          %197 = vst [vmem:[%s189 + $0x18] sm:%s181] %v196
          %v198 = vld [vmem:[%s188 + $0x20] sm:%s181]
          %199 = vst [vmem:[%s189 + $0x20] sm:%s181] %v198
          %v200 = vld [vmem:[%s188 + $0x28] sm:%s181]
          %201 = vst [vmem:[%s189 + $0x28] sm:%s181] %v200
          %v202 = vld [vmem:[%s188 + $0x30] sm:%s181]
          %203 = vst [vmem:[%s189 + $0x30] sm:%s181] %v202
          %v204 = vld [vmem:[%s188 + $0x38] sm:%s181]
          %205 = vst [vmem:[%s189 + $0x38] sm:%s181] %v204
        $region52: #{reverse.0} parent=46 // loop_footer
          %s187 = sadd.s32 1, %s183
        $region53: #{reverse.0} parent=46 // loop_footer_branch
          %182 = sbr.rel target = $region49
        $region54: #{reverse.0} parent=46 // loop_exit
          _
      $region47: #{reverse.0} parent=38 // pred_fallthru
        _
    $region39: #{reverse.0} parent=1 // pred_fallthru
      _
    %234 = vnop

</llo_original>
